<compile_context>
chip_gen: v6e
topology: v6e:2x2x1
jax: 0.10.0
libtpu: 0.0.40
codegen_flags: <defaults>
</compile_context>

<pallas_src>
import jax
import jax.numpy as jnp
import numpy as np
from jax.experimental import pallas as pl
from jax.experimental.pallas import tpu as pltpu  # noqa: F401  (not needed at these shapes)


def channel_attention_kernel(x_ref, w1_ref, w2t_ref, o_ref):
    # x_ref:   (B, C, HW)  input features, spatial flattened onto the lane axis
    # w1_ref:  (Ch, C)     fc[0] = Conv2d(C, Ch, 1, bias=False) weight (natural layout)
    # w2t_ref: (Ch, C)     fc[2] = Conv2d(Ch, C, 1, bias=False) weight, pre-transposed
    # o_ref:   (B, C)      sigmoid(channel attention)
    x = x_ref[...].astype(jnp.float32)                     # (B, C, HW)
    b, c, hw = x.shape

    # AdaptiveAvgPool2d(1) / AdaptiveMaxPool2d(1): reductions over the lane axis.
    avg_pool = jnp.sum(x, axis=-1) * (1.0 / hw)            # (B, C)
    max_pool = jnp.max(x, axis=-1)                         # (B, C)

    # Batch both branches through the shared MLP in one pass.  (2B, C) still
    # fits in a single padded vreg tile at these sizes.
    p = jnp.concatenate([avg_pool, max_pool], axis=0)      # (2B, C)

    w1 = w1_ref[...].astype(jnp.float32)                   # (Ch, C)
    w2t = w2t_ref[...].astype(jnp.float32)                 # (Ch, C)
    ch = w1.shape[0]

    # Tiny 2-layer MLP without the MXU (Ch is tiny and static -> unrolled):
    #   h[:, j] = relu( sum_c p[:, c] * w1[j, c] )    VPU multiply + XLU lane-reduce
    #   y      += h[:, j] * w2t[j, :]                 outer product on the VPU
    y = jnp.zeros(p.shape, jnp.float32)                    # (2B, C)
    for j in range(ch):
        w1j = w1[j:j + 1, :]                               # (1, C)
        w2j = w2t[j:j + 1, :]                              # (1, C)
        hj = jnp.sum(p * w1j, axis=-1, keepdims=True)      # (2B, 1)
        hj = jnp.maximum(hj, 0.0)                          # ReLU
        y = y + hj * w2j                                   # (2B, C)

    # Split the stacked result back into the avg / max branches and combine.
    att = jax.nn.sigmoid(y[:b] + y[b:])                    # (B, C)
    o_ref[...] = att.astype(o_ref.dtype)


def channel_attention(x, w1, w2t):
    """ChannelAttention forward.

    x:   (B, C, H, W) NCHW features.
    w1:  (C//ratio, C)   fc[0].weight with the trailing 1x1 squeezed (natural layout).
    w2t: (C//ratio, C)   fc[2].weight pre-stored transposed (done once at load time,
                         not per call, so no extra XLA transpose op in the hot path).
    Returns the attention map of shape (B, C, 1, 1), matching the PyTorch module.
    """
    B, C, H, W = x.shape
    HW = H * W
    x_flat = x.reshape(B, C, HW)   # layout-preserving reshape (no data movement)

    out = pl.pallas_call(
        channel_attention_kernel,
        out_shape=jax.ShapeDtypeStruct((B, C), x.dtype),
        in_specs=[
            pl.BlockSpec((B, C, HW), lambda: (0, 0, 0)),
            pl.BlockSpec(w1.shape, lambda: (0, 0)),
            pl.BlockSpec(w2t.shape, lambda: (0, 0)),
        ],
        out_specs=pl.BlockSpec((B, C), lambda: (0, 0)),
    )(x_flat, w1, w2t)

    return out.reshape(B, C, 1, 1)


def channel_attention_ref(x, w1, w2):
    """Pure-JAX reference mirroring the PyTorch forward (w2 in PyTorch (C, Ch) layout)."""
    B, C, H, W = x.shape
    avg = jnp.mean(x, axis=(2, 3))                 # (B, C)
    mx = jnp.max(x, axis=(2, 3))                   # (B, C)

    def fc(p):
        h = jnp.maximum(p @ w1.T, 0.0)             # (B, Ch)
        return h @ w2.T                            # (B, C)

    return jax.nn.sigmoid(fc(avg) + fc(mx)).reshape(B, C, 1, 1)


if __name__ == "__main__":
    # Module config: in_planes=32, ratio=16  ->  hidden channels = 2.
    B, C, H, W = 2, 32, 16, 16
    ratio = 16
    Ch = C // ratio

    key = jax.random.PRNGKey(0)
    kx, k1, k2 = jax.random.split(key, 3)

    x = jax.random.normal(kx, (B, C, H, W), dtype=jnp.float32)
    # Conv2d weights (kernel_size=1, bias=False): shapes (out, in, 1, 1) -> squeezed.
    w1 = jax.random.normal(k1, (Ch, C), dtype=jnp.float32) * 0.1   # fc[0].weight
    w2 = jax.random.normal(k2, (C, Ch), dtype=jnp.float32) * 0.1   # fc[2].weight

    # Pre-store fc[2].weight transposed (one-time parameter preprocessing).
    w2t = jnp.transpose(w2)                                        # (Ch, C)

    out = channel_attention(x, w1, w2t)
    out = jax.block_until_ready(out)

    ref = channel_attention_ref(x, w1, w2)
    assert out.shape == (B, C, 1, 1)
    np.testing.assert_allclose(np.asarray(out), np.asarray(ref), rtol=1e-5, atol=1e-5)

    print("KERNEL_OK")
</pallas_src>

<mosaic_0001>
module attributes {stable_mosaic.version = 11 : i64} {
  func.func @channel_attention_kernel(%arg0: memref<2x32x256xf32, #tpu.memory_space<vmem>>, %arg1: memref<2x32xf32, #tpu.memory_space<vmem>>, %arg2: memref<2x32xf32, #tpu.memory_space<vmem>>, %arg3: memref<2x32xf32, #tpu.memory_space<vmem>>) attributes {dimension_semantics = [], scalar_prefetch = 0 : i64, scratch_operands = 0 : i64, tpu.core_type = #tpu.core_type<tc>} {
    %c0 = arith.constant 0 : index
    %c0_0 = arith.constant 0 : index
    %c0_1 = arith.constant 0 : index
    %0 = vector.load %arg0[%c0, %c0_0, %c0_1] : memref<2x32x256xf32, #tpu.memory_space<vmem>>, vector<2x32x256xf32>
    %cst = arith.constant dense<0.000000e+00> : vector<2x32xf32>
    %1 = vector.multi_reduction <add>, %0, %cst [2] : vector<2x32x256xf32> to vector<2x32xf32>
    %cst_2 = arith.constant 3.906250e-03 : f32
    %2 = vector.broadcast %cst_2 : f32 to vector<2x32xf32>
    %3 = arith.mulf %1, %2 : vector<2x32xf32>
    %cst_3 = arith.constant dense<0xFF800000> : vector<2x32xf32>
    %4 = vector.multi_reduction <maximumf>, %0, %cst_3 [2] : vector<2x32x256xf32> to vector<2x32xf32>
    %5 = tpu.concatenate %3, %4 in 0 : vector<2x32xf32>, vector<2x32xf32> -> vector<4x32xf32>
    %c0_4 = arith.constant 0 : index
    %c0_5 = arith.constant 0 : index
    %6 = vector.load %arg1[%c0_4, %c0_5] : memref<2x32xf32, #tpu.memory_space<vmem>>, vector<2x32xf32>
    %c0_6 = arith.constant 0 : index
    %c0_7 = arith.constant 0 : index
    %7 = vector.load %arg2[%c0_6, %c0_7] : memref<2x32xf32, #tpu.memory_space<vmem>>, vector<2x32xf32>
    %cst_8 = arith.constant 0.000000e+00 : f32
    %8 = vector.broadcast %cst_8 : f32 to vector<4x32xf32>
    %9 = vector.extract_strided_slice %6 {offsets = [0, 0], sizes = [1, 32], strides = [1, 1]} : vector<2x32xf32> to vector<1x32xf32>
    %10 = vector.extract_strided_slice %7 {offsets = [0, 0], sizes = [1, 32], strides = [1, 1]} : vector<2x32xf32> to vector<1x32xf32>
    %11 = vector.broadcast %9 : vector<1x32xf32> to vector<4x32xf32>
    %12 = arith.mulf %5, %11 : vector<4x32xf32>
    %cst_9 = arith.constant dense<0.000000e+00> : vector<4xf32>
    %13 = vector.multi_reduction <add>, %12, %cst_9 [1] : vector<4x32xf32> to vector<4xf32>
    %14 = vector.shape_cast %13 : vector<4xf32> to vector<4x1xf32>
    %cst_10 = arith.constant 0.000000e+00 : f32
    %15 = vector.broadcast %cst_10 : f32 to vector<4x1xf32>
    %16 = arith.maximumf %14, %15 : vector<4x1xf32>
    %17 = vector.broadcast %16 : vector<4x1xf32> to vector<4x32xf32>
    %18 = vector.broadcast %10 : vector<1x32xf32> to vector<4x32xf32>
    %19 = arith.mulf %17, %18 : vector<4x32xf32>
    %20 = arith.addf %8, %19 : vector<4x32xf32>
    %21 = vector.extract_strided_slice %6 {offsets = [1, 0], sizes = [1, 32], strides = [1, 1]} : vector<2x32xf32> to vector<1x32xf32>
    %22 = vector.extract_strided_slice %7 {offsets = [1, 0], sizes = [1, 32], strides = [1, 1]} : vector<2x32xf32> to vector<1x32xf32>
    %23 = vector.broadcast %21 : vector<1x32xf32> to vector<4x32xf32>
    %24 = arith.mulf %5, %23 : vector<4x32xf32>
    %cst_11 = arith.constant dense<0.000000e+00> : vector<4xf32>
    %25 = vector.multi_reduction <add>, %24, %cst_11 [1] : vector<4x32xf32> to vector<4xf32>
    %26 = vector.shape_cast %25 : vector<4xf32> to vector<4x1xf32>
    %cst_12 = arith.constant 0.000000e+00 : f32
    %27 = vector.broadcast %cst_12 : f32 to vector<4x1xf32>
    %28 = arith.maximumf %26, %27 : vector<4x1xf32>
    %29 = vector.broadcast %28 : vector<4x1xf32> to vector<4x32xf32>
    %30 = vector.broadcast %22 : vector<1x32xf32> to vector<4x32xf32>
    %31 = arith.mulf %29, %30 : vector<4x32xf32>
    %32 = arith.addf %20, %31 : vector<4x32xf32>
    %33 = vector.extract_strided_slice %32 {offsets = [0, 0], sizes = [2, 32], strides = [1, 1]} : vector<4x32xf32> to vector<2x32xf32>
    %34 = vector.extract_strided_slice %32 {offsets = [2, 0], sizes = [2, 32], strides = [1, 1]} : vector<4x32xf32> to vector<2x32xf32>
    %35 = arith.addf %33, %34 : vector<2x32xf32>
    %36 = arith.negf %35 : vector<2x32xf32>
    %37 = math.exp %36 : vector<2x32xf32>
    %cst_13 = arith.constant 1.000000e+00 : f32
    %38 = vector.broadcast %cst_13 : f32 to vector<2x32xf32>
    %39 = arith.addf %38, %37 : vector<2x32xf32>
    %40 = arith.divf %38, %39 : vector<2x32xf32>
    %c0_14 = arith.constant 0 : index
    %c0_15 = arith.constant 0 : index
    %41 = vector.load %arg3[%c0_14, %c0_15] : memref<2x32xf32, #tpu.memory_space<vmem>>, vector<2x32xf32>
    tpu.vector_store %arg3[%c0_14, %c0_15], %40 {strides = array<i32>} : memref<2x32xf32, #tpu.memory_space<vmem>>, vector<2x32xf32>,
    return
  }
}

</mosaic_0001>

<llo_original>
// kernel: tpu_custom_call.1
$region0: #{tpu_custom_call.1}
  #allocation0 [shape = 'u32[]', space=smem, size = 0x4, offset = 0x4, fixed_abs, tag = 'smem constant byte address 0x4 - core index']
  #allocation1 [shape = 'u32[144,128]{1,0:T(1,128)}', space=vmem, size = 0x12000, scoped, tag = 'internal scratch']
  %s0 = inlined_call_operand.hbm [shape: f32[2,32,256], index: 0, kind: input, shape index: {}]
  %s1 = inlined_call_operand.hbm [shape: f32[2,32], index: 1, kind: input, shape index: {}]
  %s2 = inlined_call_operand.vmem [shape: f32[2,32], index: 2, kind: input, shape index: {}]
  %s3 = inlined_call_operand.hbm [shape: f32[2,32], index: 3, kind: output, shape index: {}]
  %s4 = sld [smem:[#allocation0]]
  $region30: #{tpu_custom_call.1} parent=0
    _
  %s6 = ssub.s32 1, %s4
  %s7 = scalar_select 0, %s6, %s4
  $region1: #{tpu_custom_call.1} parent=0
    #allocation2 [shape = 'u8[65536]{0}', space=vmem, size = 0x10000, scoped, tag = 'input window, operand 0, single buffered']
    #allocation3 [shape = 's32[1]{0}', space=sflag, size = 0x4, scoped, tag = 'scoped memory for tpu_custom_call.1']
    #allocation4 [shape = 's32[1]{0}', space=sflag, size = 0x4, scoped, tag = 'scoped memory for tpu_custom_call.1']
    #allocation5 [shape = 'u8[1024]{0}', space=vmem, size = 0x400, scoped, tag = 'input window, operand 1, single buffered']
    #allocation6 [shape = 's32[1]{0}', space=sflag, size = 0x4, scoped, tag = 'scoped memory for tpu_custom_call.1']
    #allocation7 [shape = 'u8[1024]{0}', space=vmem, size = 0x400, scoped, tag = 'output window, operand 0, single buffered']
    %8 = vsyncpa [#allocation3], 0
    %9 = vsyncpa [#allocation6], 0
    %10 = vsyncpa [#allocation4], 0
    // Predicated region
    $region2: #{tpu_custom_call.1} parent=1 // pred_check
      _
    $region3: #{tpu_custom_call.1} parent=1 // pred_check_branch
      %12 = sbr.rel (0) target = $region5
    $region4: #{tpu_custom_call.1} parent=1 // pred_region
      %s14 = ssub.s32 2048, 2048
      %15 = vsyncadd [#allocation3], %s14
      %s16 = sshll.u32 [#allocation2], 4
      %s17 = int_to_ptr.vmem [resolvable:$true] %s16
      %22 = dma.hbm_to_vmem [thread:$0]  %s0, 2048, %s17, [#allocation3], 256, 256, 16
    $region5: #{tpu_custom_call.1} parent=1 // pred_fallthru
      _
    // Predicated region
    $region6: #{tpu_custom_call.1} parent=1 // pred_check
      _
    $region7: #{tpu_custom_call.1} parent=1 // pred_check_branch
      %24 = sbr.rel (0) target = $region9
    $region8: #{tpu_custom_call.1} parent=1 // pred_region
      %s26 = ssub.s32 32, 32
      %27 = vsyncadd [#allocation6], %s26
      %s29 = sshll.u32 [#allocation5], 4
      %s30 = int_to_ptr.vmem [resolvable:$true] %s29
      %32 = dma.hbm_to_vmem [thread:$0]  %s1, 32, %s30, [#allocation6]
    $region9: #{tpu_custom_call.1} parent=1 // pred_fallthru
      _
    // Predicated region
    $region10: #{tpu_custom_call.1} parent=1 // pred_check
      _
    $region11: #{tpu_custom_call.1} parent=1 // pred_check_branch
      %34 = sbr.rel (0) target = $region13
    $region12: #{tpu_custom_call.1} parent=1 // pred_region
      _
    $region13: #{tpu_custom_call.1} parent=1 // pred_fallthru
      _
    // Predicated region
    $region14: #{tpu_custom_call.1} parent=1 // pred_check
      _
    $region15: #{tpu_custom_call.1} parent=1 // pred_check_branch
      %36 = sbr.rel (0) target = $region17
    $region16: #{tpu_custom_call.1} parent=1 // pred_region
      %37 = dma.done [#allocation3], 2048
    $region17: #{tpu_custom_call.1} parent=1 // pred_fallthru
      _
    // Predicated region
    $region18: #{tpu_custom_call.1} parent=1 // pred_check
      _
    $region19: #{tpu_custom_call.1} parent=1 // pred_check_branch
      %39 = sbr.rel (0) target = $region21
    $region20: #{tpu_custom_call.1} parent=1 // pred_region
      %40 = dma.done [#allocation6], 32
    $region21: #{tpu_custom_call.1} parent=1 // pred_fallthru
      _
    %v41 = vld [vmem:[#allocation2] sm:$0xff]
    %v42 = vld [vmem:[#allocation2 + $0x8] sm:$0xff]
    %v43 = vld [vmem:[#allocation2 + $0x10] sm:$0xff]
    %v44 = vld [vmem:[#allocation2 + $0x18] sm:$0xff]
    %v45 = vld [vmem:[#allocation2 + $0x20] sm:$0xff]
    %v46 = vld [vmem:[#allocation2 + $0x28] sm:$0xff]
    %v47 = vld [vmem:[#allocation2 + $0x30] sm:$0xff]
    %v48 = vld [vmem:[#allocation2 + $0x38] sm:$0xff]
    %v49 = vld [vmem:[#allocation2 + $0x40] sm:$0xff]
    %v50 = vld [vmem:[#allocation2 + $0x48] sm:$0xff]
    %v51 = vld [vmem:[#allocation2 + $0x50] sm:$0xff]
    %v52 = vld [vmem:[#allocation2 + $0x58] sm:$0xff]
    %v53 = vld [vmem:[#allocation2 + $0x60] sm:$0xff]
    %v54 = vld [vmem:[#allocation2 + $0x68] sm:$0xff]
    %v55 = vld [vmem:[#allocation2 + $0x70] sm:$0xff]
    %v56 = vld [vmem:[#allocation2 + $0x78] sm:$0xff]
    %v57 = vadd.f32 %v41, %v42
    %58 = vadd.xlane.f32.xlu0 %v57
    %v59 = vpop.xlane.xlu0 %58
    %v60 = vadd.f32 %v43, %v44
    %61 = vadd.xlane.f32.xlu0 %v60
    %v62 = vpop.xlane.xlu0 %61
    %v63 = vadd.f32 %v45, %v46
    %64 = vadd.xlane.f32.xlu0 %v63
    %v65 = vpop.xlane.xlu0 %64
    %v66 = vadd.f32 %v47, %v48
    %67 = vadd.xlane.f32.xlu0 %v66
    %v68 = vpop.xlane.xlu0 %67
    %v69 = vadd.f32 %v49, %v50
    %70 = vadd.xlane.f32.xlu0 %v69
    %v71 = vpop.xlane.xlu0 %70
    %v72 = vadd.f32 %v51, %v52
    %73 = vadd.xlane.f32.xlu0 %v72
    %v74 = vpop.xlane.xlu0 %73
    %v75 = vadd.f32 %v53, %v54
    %76 = vadd.xlane.f32.xlu0 %v75
    %v77 = vpop.xlane.xlu0 %76
    %v78 = vadd.f32 %v55, %v56
    %79 = vadd.xlane.f32.xlu0 %v78
    %v80 = vpop.xlane.xlu0 %79
    %v81 = vmul.f32 %v59, 0.00390625
    %v82 = vmul.f32 %v62, 0.00390625
    %v83 = vmul.f32 %v65, 0.00390625
    %v84 = vmul.f32 %v68, 0.00390625
    %v85 = vmul.f32 %v71, 0.00390625
    %v86 = vmul.f32 %v74, 0.00390625
    %v87 = vmul.f32 %v77, 0.00390625
    %v88 = vmul.f32 %v80, 0.00390625
    %v89 = vmax.f32 %v41, %v42
    %90 = vmax.xlane.f32.xlu0 %v89
    %v91 = vpop.xlane.xlu0 %90
    %v92 = vmax.f32 %v43, %v44
    %93 = vmax.xlane.f32.xlu0 %v92
    %v94 = vpop.xlane.xlu0 %93
    %v95 = vmax.f32 %v45, %v46
    %96 = vmax.xlane.f32.xlu0 %v95
    %v97 = vpop.xlane.xlu0 %96
    %v98 = vmax.f32 %v47, %v48
    %99 = vmax.xlane.f32.xlu0 %v98
    %v100 = vpop.xlane.xlu0 %99
    %v101 = vmax.f32 %v49, %v50
    %102 = vmax.xlane.f32.xlu0 %v101
    %v103 = vpop.xlane.xlu0 %102
    %v104 = vmax.f32 %v51, %v52
    %105 = vmax.xlane.f32.xlu0 %v104
    %v106 = vpop.xlane.xlu0 %105
    %v107 = vmax.f32 %v53, %v54
    %108 = vmax.xlane.f32.xlu0 %v107
    %v109 = vpop.xlane.xlu0 %108
    %v110 = vmax.f32 %v55, %v56
    %111 = vmax.xlane.f32.xlu0 %v110
    %v112 = vpop.xlane.xlu0 %111
    %v121 = vlaneseq
    %v122 = vand.u32 %v121, 127
    %v123 = vlaneseq
    %v124 = vshrl.u32 %v123, 7
    %v125 = vsub.s32 %v122, %v124
    %v126 = vrot.slane %v81, %v125
    %v127 = vadd.s32 %v122, 4294967288
    %v128 = vlaneseq
    %v129 = vshrl.u32 %v128, 7
    %v130 = vsub.s32 %v127, %v129
    %v131 = vrot.slane %v82, %v130
    %vm132 = vcmask 130112
    %v133 = vsel %vm132, %v131, %v126
    %v134 = vadd.s32 %v122, 4294967280
    %v135 = vlaneseq
    %v136 = vshrl.u32 %v135, 7
    %v137 = vsub.s32 %v134, %v136
    %v138 = vrot.slane %v83, %v137
    %vm139 = vcmask 195712
    %v140 = vsel %vm139, %v138, %v133
    %v141 = vadd.s32 %v122, 4294967272
    %v142 = vlaneseq
    %v143 = vshrl.u32 %v142, 7
    %v144 = vsub.s32 %v141, %v143
    %v145 = vrot.slane %v84, %v144
    %vm146 = vcmask 261312
    %v147 = vsel %vm146, %v145, %v140
    %v148 = vlaneseq
    %v149 = vshrl.u32 %v148, 7
    %v150 = vsub.s32 %v122, %v149
    %v151 = vrot.slane %v85, %v150
    %v152 = vlaneseq
    %v153 = vshrl.u32 %v152, 7
    %v154 = vsub.s32 %v127, %v153
    %v155 = vrot.slane %v86, %v154
    %v156 = vsel %vm132, %v155, %v151
    %v157 = vlaneseq
    %v158 = vshrl.u32 %v157, 7
    %v159 = vsub.s32 %v134, %v158
    %v160 = vrot.slane %v87, %v159
    %v161 = vsel %vm139, %v160, %v156
    %v162 = vlaneseq
    %v163 = vshrl.u32 %v162, 7
    %v164 = vsub.s32 %v141, %v163
    %v165 = vrot.slane %v88, %v164
    %v166 = vsel %vm146, %v165, %v161
    %vm167 = vcmask 1041409
    %v168 = vsel %vm167, %v166, %v147
    %v178 = vlaneseq
    %v179 = vshrl.u32 %v178, 7
    %v180 = vsub.s32 %v122, %v179
    %v181 = vrot.slane %v91, %v180
    %v182 = vlaneseq
    %v183 = vshrl.u32 %v182, 7
    %v184 = vsub.s32 %v127, %v183
    %v185 = vrot.slane %v94, %v184
    %v186 = vsel %vm132, %v185, %v181
    %v187 = vlaneseq
    %v188 = vshrl.u32 %v187, 7
    %v189 = vsub.s32 %v134, %v188
    %v190 = vrot.slane %v97, %v189
    %v191 = vsel %vm139, %v190, %v186
    %v192 = vlaneseq
    %v193 = vshrl.u32 %v192, 7
    %v194 = vsub.s32 %v141, %v193
    %v195 = vrot.slane %v100, %v194
    %v196 = vsel %vm146, %v195, %v191
    %v197 = vlaneseq
    %v198 = vshrl.u32 %v197, 7
    %v199 = vsub.s32 %v122, %v198
    %v200 = vrot.slane %v103, %v199
    %v201 = vlaneseq
    %v202 = vshrl.u32 %v201, 7
    %v203 = vsub.s32 %v127, %v202
    %v204 = vrot.slane %v106, %v203
    %v205 = vsel %vm132, %v204, %v200
    %v206 = vlaneseq
    %v207 = vshrl.u32 %v206, 7
    %v208 = vsub.s32 %v134, %v207
    %v209 = vrot.slane %v109, %v208
    %v210 = vsel %vm139, %v209, %v205
    %v211 = vlaneseq
    %v212 = vshrl.u32 %v211, 7
    %v213 = vsub.s32 %v141, %v212
    %v214 = vrot.slane %v112, %v213
    %v215 = vsel %vm146, %v214, %v210
    %vm216 = vcmask 1043459
    %v217 = vsel %vm216, %v215, %v196
    %vm219 = vcmask 1041408
    %v220 = vsel %vm219, %v168, %v217
    %v221 = vld [vmem:[#allocation5] sm:$0x3]
    %v222 = vld [vmem:[%s2] sm:$0x3]
    %v223 = vlaneseq
    %v224 = vshrl.u32 %v223, 7
    %v225 = vsub.s32 0, %v224
    %v226 = vrot.slane %v221, %v225
    %v227 = vmul.f32 %v220, %v226
    %vm228 = vcmask 257024
    %v229 = vsel %vm228, %v227, 0.0
    %230 = vadd.xlane.f32.xlu0 %v229
    %v231 = vpop.xlane.xlu0 %230
    %v232 = vmax.f32 %v231, 0.0
    %v233 = vlaneseq
    %v234 = vshrl.u32 %v233, 7
    %v235 = vsub.s32 0, %v234
    %v236 = vrot.slane %v222, %v235
    %v237 = vmul.f32 %v232, %v236
    %v238 = vadd.f32 %v237, 0.0
    %v239 = vlaneseq
    %v240 = vshrl.u32 %v239, 7
    %v241 = vsub.s32 1, %v240
    %v242 = vrot.slane %v221, %v241
    %v243 = vmul.f32 %v220, %v242
    %v244 = vsel %vm228, %v243, 0.0
    %245 = vadd.xlane.f32.xlu0 %v244
    %v246 = vpop.xlane.xlu0 %245
    %v247 = vmax.f32 %v246, 0.0
    %v248 = vlaneseq
    %v249 = vshrl.u32 %v248, 7
    %v250 = vsub.s32 1, %v249
    %v251 = vrot.slane %v222, %v250
    %v252 = vmul.f32 %v247, %v251
    %v253 = vadd.f32 %v238, %v252
    %v255 = vrot.slane %v253, 2
    %v257 = vadd.f32 %v253, %v255
    %v258 = vxor.u32 %v257, 2147483648
    %v259 = vmul.f32 %v258, 1.442695
    %v260 = vpow.pop %v259
    %v261 = vadd.f32 %v260, 1.0
    %v262 = vrcp.pop %v261
    %v263 = vmul.f32 1.0, %v262
    %vm264 = vcmask 254976
    %265 = vst.msk [vmem:[#allocation7] sm:$0x3] %vm264, %v263
    // Predicated region
    $region22: #{tpu_custom_call.1} parent=1 // pred_check
      _
    $region23: #{tpu_custom_call.1} parent=1 // pred_check_branch
      %267 = sbr.rel (0) target = $region25
    $region24: #{tpu_custom_call.1} parent=1 // pred_region
      %s269 = ssub.s32 32, 32
      %270 = vsyncadd [#allocation4], %s269
      %s272 = sshll.u32 [#allocation7], 4
      %s273 = int_to_ptr.vmem [resolvable:$true] %s272
      %275 = dma.vmem_to_hbm [thread:$0]  %s273, 32, %s3, [#allocation4]
    $region25: #{tpu_custom_call.1} parent=1 // pred_fallthru
      _
    // Predicated region
    $region26: #{tpu_custom_call.1} parent=1 // pred_check
      _
    $region27: #{tpu_custom_call.1} parent=1 // pred_check_branch
      %277 = sbr.rel (0) target = $region29
    $region28: #{tpu_custom_call.1} parent=1 // pred_region
      %278 = dma.done [#allocation4], 32
    $region29: #{tpu_custom_call.1} parent=1 // pred_fallthru
      _
    %279 = vsyncpa [#allocation3], 1
    %280 = vsyncpa [#allocation6], 1
    %281 = vsyncpa [#allocation4], 1

</llo_original>
